<compile_context>
chip_gen: v5e
topology: v5e:2x2
jax: 0.10.0
libtpu: 0.0.40
codegen_flags: <defaults>
</compile_context>

<pallas_src>
import jax
import jax.numpy as jnp
from jax.experimental import pallas as pl
from jax.experimental.pallas import tpu as pltpu


def _round_up(v, m):
    return ((v + m - 1) // m) * m


def _fused_nodes_kernel(x_ref, w_ref, scale_ref, bias_ref, o_ref):
    """One batch tile of the fused SDT inner-node gating.

    x_ref:     [TB, D]   VMEM  batch tile (pipelined over the grid)
    w_ref:     [D,  Np]  VMEM  all node weights, lane-dense (resident)
    scale_ref: [1,  Np]  VMEM  per-node beta
    bias_ref:  [1,  Np]  VMEM  per-node beta * b
    o_ref:     [TB, Np]  VMEM  routing probabilities (lane-dense output)
    """
    # Real MXU matmul, f32 accumulation regardless of input dtype.
    acc = jnp.dot(x_ref[...], w_ref[...], preferred_element_type=jnp.float32)
    z = acc * scale_ref[...] + bias_ref[...]
    # sigmoid: exp on EUP, approximate reciprocal also on EUP (frees VALU slots).
    o_ref[...] = pl.reciprocal(1.0 + jnp.exp(-z), approx=True).astype(o_ref.dtype)


def _vmem_buffer_bytes(tb, D, n_pad, x_itemsize):
    """Approximate double-buffered VMEM footprint (with (8,128) layout padding)."""
    d_lane = _round_up(D, 128)
    x_b = 2 * tb * d_lane * x_itemsize          # x tile, double-buffered
    w_b = 2 * _round_up(D, 8) * n_pad * x_itemsize  # W (resident, conservatively x2)
    sb_b = 2 * 2 * 8 * n_pad * 4                # scale + bias rows
    o_b = 2 * tb * n_pad * 4                    # f32 output tile, double-buffered
    return x_b + w_b + sb_b + o_b


def _pick_batch_tile(B, D, n_pad, x_itemsize,
                     budget_bytes=20 * 1024 * 1024,
                     target_x_bytes=4 * 1024 * 1024):
    """Pick TB (multiple of 8) by a byte target, under a conservative VMEM budget.

    Ensures >=2 grid steps when B allows, so both v7x TensorCores stream.
    """
    if B <= 8:
        return B
    d_lane = _round_up(D, 128)
    per_row = 2 * (d_lane * x_itemsize + n_pad * 4)      # x + out rows, double-buffered
    fixed = (2 * _round_up(D, 8) * n_pad * x_itemsize    # W
             + 2 * 2 * 8 * n_pad * 4)                    # scale/bias
    avail = max(per_row * 8, budget_bytes - fixed)
    rows_budget = avail // per_row
    rows_target = max(8, target_x_bytes // (d_lane * x_itemsize))
    tb = min(B, int(rows_budget), int(rows_target))
    tb = max(8, (tb // 8) * 8)
    if tb >= B:
        # Keep >= 2 grid iterations so the "parallel" batch axis can shard
        # across v7x's two TensorCores (no effect on single-TC v5e/v6e).
        tb = max(8, _round_up(pl.cdiv(B, 2), 8))
    return int(tb)


def sdt_inner_nodes_forward(x, W, b, beta):
    """Fused SDT gating: p[:, j] = sigmoid(beta_j * (x @ W[:, j] + b_j)).

    x: [B, D] (f32 or bf16); W: [D, N] (or [D] for a single node);
    b: [N] or scalar; beta: [N] or scalar.  Returns p: [B, N] float32.
    """
    x = jnp.asarray(x)
    B, D = x.shape
    W = jnp.asarray(W, x.dtype)
    if W.ndim == 1:
        W = W.reshape(D, 1)
    N = W.shape[1]

    beta_v = jnp.broadcast_to(jnp.asarray(beta, jnp.float32).reshape(-1), (N,))
    b_v = jnp.broadcast_to(jnp.asarray(b, jnp.float32).reshape(-1), (N,))

    n_pad = _round_up(max(N, 1), 128)            # lane-dense node axis
    x_itemsize = jnp.dtype(x.dtype).itemsize

    W_p = jnp.zeros((D, n_pad), x.dtype).at[:, :N].set(W)
    scale = jnp.zeros((1, n_pad), jnp.float32).at[0, :N].set(beta_v)
    bias = jnp.zeros((1, n_pad), jnp.float32).at[0, :N].set(beta_v * b_v)

    tb = _pick_batch_tile(B, D, n_pad, x_itemsize)
    num_tiles = pl.cdiv(B, tb)
    B_pad = num_tiles * tb
    x_p = x if B_pad == B else jnp.pad(x, ((0, B_pad - B), (0, 0)))

    total_vmem = _vmem_buffer_bytes(tb, D, n_pad, x_itemsize)
    vmem_limit = int(max(16 * 1024 * 1024,
                         min(60 * 1024 * 1024, total_vmem + 6 * 1024 * 1024)))

    cost = pl.CostEstimate(
        flops=2 * B_pad * D * n_pad,
        transcendentals=B_pad * n_pad,
        bytes_accessed=(B_pad * D + D * n_pad) * x_itemsize + B_pad * n_pad * 4,
    )

    out = pl.pallas_call(
        _fused_nodes_kernel,
        out_shape=jax.ShapeDtypeStruct((B_pad, n_pad), jnp.float32),
        grid=(num_tiles,),
        in_specs=[
            pl.BlockSpec((tb, D), lambda i: (i, 0)),      # x batch tile (pipelined)
            pl.BlockSpec((D, n_pad), lambda i: (0, 0)),   # W (resident across tiles)
            pl.BlockSpec((1, n_pad), lambda i: (0, 0)),   # beta row
            pl.BlockSpec((1, n_pad), lambda i: (0, 0)),   # beta*b row
        ],
        out_specs=pl.BlockSpec((tb, n_pad), lambda i: (i, 0)),
        compiler_params=pltpu.CompilerParams(
            dimension_semantics=("parallel",),            # megacore-shardable batch axis
            vmem_limit_bytes=vmem_limit,
        ),
        cost_estimate=cost,
    )(x_p, W_p, scale, bias)

    return out[:B, :N]


def sdt_inner_node_forward(x, w, b, beta):
    """Single-node convenience wrapper: p = sigmoid(beta * (x @ w + b)), [B, 1]."""
    w = jnp.asarray(w)
    if w.ndim == 1:
        w = w.reshape(-1, 1)
    return sdt_inner_nodes_forward(x, w, b, beta)


def sdt_inner_nodes_ref(x, W, b, beta):
    """Pure-JAX reference for correctness checking."""
    return jax.nn.sigmoid(beta * (x @ W + b))


if __name__ == "__main__":
    # Small deterministic example: a depth-3 SDT (7 inner nodes) on flattened
    # feature vectors.  B=16 exercises the >=2-grid-step (megacore) path.
    B, D, depth = 16, 32, 3
    N = 2 ** depth - 1
    key = jax.random.PRNGKey(0)
    kx, kw, kb = jax.random.split(key, 3)

    x = jax.random.normal(kx, (B, D), dtype=jnp.float32)
    W = jax.random.normal(kw, (D, N), dtype=jnp.float32) * 0.1
    b = jax.random.normal(kb, (N,), dtype=jnp.float32) * 0.1
    beta = jnp.float32(1.5)

    p = sdt_inner_nodes_forward(x, W, b, beta)
    p = jax.block_until_ready(p)
    p_ref = sdt_inner_nodes_ref(x, W, b, beta)
    assert p.shape == (B, N)
    # Tolerance loosened vs the original 1e-5 because of the approximate
    # EUP reciprocal in the in-kernel sigmoid.
    assert jnp.allclose(p, p_ref, atol=2e-2, rtol=2e-2), "fused mismatch vs reference"

    # Single-node path (the original per-node forward) reuses the fused kernel.
    p1 = sdt_inner_node_forward(x, W[:, :1], b[0], beta)
    p1 = jax.block_until_ready(p1)
    assert p1.shape == (B, 1)
    assert jnp.allclose(p1, p_ref[:, :1], atol=2e-2, rtol=2e-2), "single-node mismatch"

    print("KERNEL_OK")
</pallas_src>

<mosaic_0001>
module attributes {stable_mosaic.version = 11 : i64} {
  func.func @_fused_nodes_kernel(%arg0: i32, %arg1: memref<8x32xf32, #tpu.memory_space<vmem>>, %arg2: memref<32x128xf32, #tpu.memory_space<vmem>>, %arg3: memref<1x128xf32, #tpu.memory_space<vmem>>, %arg4: memref<1x128xf32, #tpu.memory_space<vmem>>, %arg5: memref<8x128xf32, #tpu.memory_space<vmem>>) attributes {dimension_semantics = [#tpu.dimension_semantics<parallel>], iteration_bounds = array<i64: 2>, scalar_prefetch = 0 : i64, scratch_operands = 0 : i64, tpu.core_type = #tpu.core_type<tc>, window_params = [{transform_indices = @transform_0, window_bounds = array<i64: 8, 32>}, {pipeline_mode = #tpu.pipeline_mode<synchronous>, transform_indices = @transform_1, window_bounds = array<i64: 32, 128>}, {pipeline_mode = #tpu.pipeline_mode<synchronous>, transform_indices = @transform_2, window_bounds = array<i64: 1, 128>}, {pipeline_mode = #tpu.pipeline_mode<synchronous>, transform_indices = @transform_3, window_bounds = array<i64: 1, 128>}, {transform_indices = @transform_4, window_bounds = array<i64: 8, 128>}]} {
    %c0 = arith.constant 0 : index
    %c0_0 = arith.constant 0 : index
    %0 = vector.load %arg1[%c0, %c0_0] : memref<8x32xf32, #tpu.memory_space<vmem>>, vector<8x32xf32>
    %c0_1 = arith.constant 0 : index
    %c0_2 = arith.constant 0 : index
    %1 = vector.load %arg2[%c0_1, %c0_2] : memref<32x128xf32, #tpu.memory_space<vmem>>, vector<32x128xf32>
    %cst = arith.constant dense<0.000000e+00> : vector<8x128xf32>
    %2 = tpu.matmul %0, %1, %cst {dimension_numbers = #tpu.dot_dimension_numbers<[1], [0], [0], [1], [0, 0, 1, 1], [], []>} : vector<8x32xf32>, vector<32x128xf32>, vector<8x128xf32> -> vector<8x128xf32>
    %c0_3 = arith.constant 0 : index
    %c0_4 = arith.constant 0 : index
    %3 = vector.load %arg3[%c0_3, %c0_4] : memref<1x128xf32, #tpu.memory_space<vmem>>, vector<1x128xf32>
    %4 = vector.broadcast %3 : vector<1x128xf32> to vector<8x128xf32>
    %5 = arith.mulf %2, %4 : vector<8x128xf32>
    %c0_5 = arith.constant 0 : index
    %c0_6 = arith.constant 0 : index
    %6 = vector.load %arg4[%c0_5, %c0_6] : memref<1x128xf32, #tpu.memory_space<vmem>>, vector<1x128xf32>
    %7 = vector.broadcast %6 : vector<1x128xf32> to vector<8x128xf32>
    %8 = arith.addf %5, %7 : vector<8x128xf32>
    %cst_7 = arith.constant 0.000000e+00 : f32
    %9 = vector.broadcast %cst_7 : f32 to vector<8x128xf32>
    %10 = arith.subf %9, %8 : vector<8x128xf32>
    %11 = math.exp %10 : vector<8x128xf32>
    %cst_8 = arith.constant 1.000000e+00 : f32
    %12 = vector.broadcast %cst_8 : f32 to vector<8x128xf32>
    %13 = arith.addf %12, %11 : vector<8x128xf32>
    %14 = tpu.reciprocal %13 {approx = true} : vector<8x128xf32> -> vector<8x128xf32>
    %c0_9 = arith.constant 0 : index
    %c0_10 = arith.constant 0 : index
    %15 = vector.load %arg5[%c0_9, %c0_10] : memref<8x128xf32, #tpu.memory_space<vmem>>, vector<8x128xf32>
    tpu.vector_store %arg5[%c0_9, %c0_10], %14 {strides = array<i32>} : memref<8x128xf32, #tpu.memory_space<vmem>>, vector<8x128xf32>,
    return
  }
  func.func @transform_0(%arg0: i32) -> (i32, i32) {
    %c0_i32 = arith.constant 0 : i32
    %c0_i32_0 = arith.constant 0 : i32
    return %arg0, %c0_i32 : i32, i32
  }
  func.func @transform_1(%arg0: i32) -> (i32, i32) {
    %c0_i32 = arith.constant 0 : i32
    %c0_i32_0 = arith.constant 0 : i32
    %c0_i32_1 = arith.constant 0 : i32
    return %c0_i32, %c0_i32_0 : i32, i32
  }
  func.func @transform_2(%arg0: i32) -> (i32, i32) {
    %c0_i32 = arith.constant 0 : i32
    %c0_i32_0 = arith.constant 0 : i32
    %c0_i32_1 = arith.constant 0 : i32
    return %c0_i32, %c0_i32_0 : i32, i32
  }
  func.func @transform_3(%arg0: i32) -> (i32, i32) {
    %c0_i32 = arith.constant 0 : i32
    %c0_i32_0 = arith.constant 0 : i32
    %c0_i32_1 = arith.constant 0 : i32
    return %c0_i32, %c0_i32_0 : i32, i32
  }
  func.func @transform_4(%arg0: i32) -> (i32, i32) {
    %c0_i32 = arith.constant 0 : i32
    %c0_i32_0 = arith.constant 0 : i32
    return %arg0, %c0_i32 : i32, i32
  }
}

</mosaic_0001>

<llo_original>
// kernel: tpu_custom_call.1
$region0: #{tpu_custom_call.1}
  #allocation0 [shape = 'u32[]', space=smem, size = 0x4, offset = 0x4, fixed_abs, tag = 'smem constant byte address 0x4 - core index']
  #allocation1 [shape = 'u32[72,128]{1,0:T(1,128)}', space=vmem, size = 0x9000, scoped, tag = 'internal scratch']
  %s0 = inlined_call_operand.hbm [shape: f32[16,32], index: 0, kind: input, shape index: {}]
  %s1 = inlined_call_operand.hbm [shape: f32[32,128], index: 1, kind: input, shape index: {}]
  %s2 = inlined_call_operand.vmem [shape: f32[1,128], index: 2, kind: input, shape index: {}]
  %s3 = inlined_call_operand.vmem [shape: f32[1,128], index: 3, kind: input, shape index: {}]
  %s4 = inlined_call_operand.hbm [shape: f32[16,128], index: 4, kind: output, shape index: {}]
  %s5 = sld [smem:[#allocation0]]
  $region57: #{tpu_custom_call.1} parent=0
    _
  %s7 = ssub.s32 1, %s5
  %s8 = scalar_select 0, %s7, %s5
  $region1: #{tpu_custom_call.1} parent=0
    #allocation2 [shape = 'u8[8192]{0}', space=vmem, size = 0x2000, scoped, tag = 'input window, operand 0']
    #allocation3 [shape = 's32[2]{0}', space=sflag, size = 0x8, scoped, tag = 'scoped memory for tpu_custom_call.1']
    #allocation4 [shape = 's32[2]{0}', space=sflag, size = 0x8, scoped, tag = 'scoped memory for tpu_custom_call.1']
    #allocation5 [shape = 'u8[16384]{0}', space=vmem, size = 0x4000, scoped, tag = 'input window, operand 1, single buffered']
    #allocation6 [shape = 's32[1]{0}', space=sflag, size = 0x4, scoped, tag = 'scoped memory for tpu_custom_call.1']
    #allocation7 [shape = 'u8[8192]{0}', space=vmem, size = 0x2000, scoped, tag = 'output window, operand 0']
    %9 = vsyncpa [#allocation3], 0
    %s10 = scalar_lea.sflag [#allocation3], 1
    %11 = vsyncpa %s10, 0
    %12 = vsyncpa [#allocation6], 0
    %13 = vsyncpa [#allocation4], 0
    %s14 = scalar_lea.sflag [#allocation4], 1
    %15 = vsyncpa %s14, 0
    loop: start=0, step=1, limit=4
    $region2: #{tpu_custom_call.1} parent=1 // loop_pre_header
      _
    $region3: #{tpu_custom_call.1} parent=1 // loop_header
      %s17 = sphi 0, %s21
      %p18 = scmp.ge.s32.totalorder %s17, 4
      %s27 = sphi 0, %s29
      %s30 = sphi 0, %s27
      %s31 = sphi 0, %s30
      %s47 = sphi 0, %s31
      %s51 = sphi 0, %s51
      %s53 = sphi 0, %s51
      %s54 = sphi 0, %s53
      %s68 = sphi 0, %s54
      %s72 = sphi 0, %s72
      %s74 = sphi 0, %s72
      %s75 = sphi 0, %s74
      %s89 = sphi 0, %s75
      %s93 = sphi 0, %s93
      %s95 = sphi 0, %s93
      %s96 = sphi 0, %s95
      %s110 = sphi 0, %s96
      %s116 = sphi 0, %s118
      %s119 = sphi 0, %s116
      %s120 = sphi 0, %s119
      %s136 = sphi 0, %s120
    $region4: #{tpu_custom_call.1} parent=1 // loop_header_branch
      %20 = sbr.rel (%p18) target = $region8
    $region5: #{tpu_custom_call.1} parent=1 // loop_body
      %s22 = ssub.s32 %s17, 1
      %s23 = ssub.s32 %s17, 2
      %s24 = sadd.s32 %s17, 1
      %s25 = ssub.s32 %s17, %s24
      %p26 = scmp.eq.s32.totalorder %s25, 0
      %s28 = sadd.s32 %s27, 1
      %s29 = scalar_select %p26, %s27, %s28
      %p32 = pneg %p26
      %p33 = scmp.eq.s32.totalorder %s17, 1
      %p34 = por %p32, %p33
      %p35 = scmp.ne.s32.totalorder %s27, %s30
      %p36 = scmp.eq.s32.totalorder %s17, 0
      %p37 = por %p35, %p36
      %p38 = scmp.ne.s32.totalorder %s27, %s30
      %p39 = scmp.eq.s32.totalorder %s22, 1
      %p40 = por %p38, %p39
      %p41 = scmp.ne.s32.totalorder %s30, %s31
      %p42 = scmp.eq.s32.totalorder %s22, 0
      %p43 = por %p41, %p42
      %p44 = scmp.ne.s32.totalorder %s30, %s31
      %p45 = scmp.eq.s32.totalorder %s23, 1
      %p46 = por %p44, %p45
      %p48 = scmp.ne.s32.totalorder %s31, %s47
      %p49 = scmp.eq.s32.totalorder %s23, 0
      %p50 = por %p48, %p49
      %s52 = sadd.s32 %s51, 1
      %p55 = scmp.eq.s32.totalorder %s17, 1
      %p56 = scmp.ne.s32.totalorder %s51, %s53
      %p57 = scmp.eq.s32.totalorder %s17, 0
      %p58 = por %p56, %p57
      %p59 = scmp.ne.s32.totalorder %s51, %s53
      %p60 = scmp.eq.s32.totalorder %s22, 1
      %p61 = por %p59, %p60
      %p62 = scmp.ne.s32.totalorder %s53, %s54
      %p63 = scmp.eq.s32.totalorder %s22, 0
      %p64 = por %p62, %p63
      %p65 = scmp.ne.s32.totalorder %s53, %s54
      %p66 = scmp.eq.s32.totalorder %s23, 1
      %p67 = por %p65, %p66
      %p69 = scmp.ne.s32.totalorder %s54, %s68
      %p70 = scmp.eq.s32.totalorder %s23, 0
      %p71 = por %p69, %p70
      %s73 = sadd.s32 %s72, 1
      %p76 = scmp.eq.s32.totalorder %s17, 1
      %p77 = scmp.ne.s32.totalorder %s72, %s74
      %p78 = scmp.eq.s32.totalorder %s17, 0
      %p79 = por %p77, %p78
      %p80 = scmp.ne.s32.totalorder %s72, %s74
      %p81 = scmp.eq.s32.totalorder %s22, 1
      %p82 = por %p80, %p81
      %p83 = scmp.ne.s32.totalorder %s74, %s75
      %p84 = scmp.eq.s32.totalorder %s22, 0
      %p85 = por %p83, %p84
      %p86 = scmp.ne.s32.totalorder %s74, %s75
      %p87 = scmp.eq.s32.totalorder %s23, 1
      %p88 = por %p86, %p87
      %p90 = scmp.ne.s32.totalorder %s75, %s89
      %p91 = scmp.eq.s32.totalorder %s23, 0
      %p92 = por %p90, %p91
      %s94 = sadd.s32 %s93, 1
      %p97 = scmp.eq.s32.totalorder %s17, 1
      %p98 = scmp.ne.s32.totalorder %s93, %s95
      %p99 = scmp.eq.s32.totalorder %s17, 0
      %p100 = por %p98, %p99
      %p101 = scmp.ne.s32.totalorder %s93, %s95
      %p102 = scmp.eq.s32.totalorder %s22, 1
      %p103 = por %p101, %p102
      %p104 = scmp.ne.s32.totalorder %s95, %s96
      %p105 = scmp.eq.s32.totalorder %s22, 0
      %p106 = por %p104, %p105
      %p107 = scmp.ne.s32.totalorder %s95, %s96
      %p108 = scmp.eq.s32.totalorder %s23, 1
      %p109 = por %p107, %p108
      %p111 = scmp.ne.s32.totalorder %s96, %s110
      %p112 = scmp.eq.s32.totalorder %s23, 0
      %p113 = por %p111, %p112
      %s114 = ssub.s32 %s17, %s24
      %p115 = scmp.eq.s32.totalorder %s114, 0
      %s117 = sadd.s32 %s116, 1
      %s118 = scalar_select %p115, %s116, %s117
      %p121 = pneg %p115
      %p122 = scmp.eq.s32.totalorder %s17, 1
      %p123 = por %p121, %p122
      %p124 = scmp.ne.s32.totalorder %s116, %s119
      %p125 = scmp.eq.s32.totalorder %s17, 0
      %p126 = por %p124, %p125
      %p127 = scmp.ne.s32.totalorder %s116, %s119
      %p128 = scmp.eq.s32.totalorder %s22, 1
      %p129 = por %p127, %p128
      %p130 = scmp.ne.s32.totalorder %s119, %s120
      %p131 = scmp.eq.s32.totalorder %s22, 0
      %p132 = por %p130, %p131
      %p133 = scmp.ne.s32.totalorder %s119, %s120
      %p134 = scmp.eq.s32.totalorder %s23, 1
      %p135 = por %p133, %p134
      %p137 = scmp.ne.s32.totalorder %s120, %s136
      %p138 = scmp.eq.s32.totalorder %s23, 0
      %p139 = por %p137, %p138
      %p140 = scmp.le.s32.totalorder 1, %s17
      %p141 = scmp.lt.s32.totalorder %s17, 3
      %p142 = pnand %p140, %p141
      %p143 = pneg %p142
      // Predicated region
      $region9: #{tpu_custom_call.1} parent=5 // pred_check
        _
      $region10: #{tpu_custom_call.1} parent=5 // pred_check_branch
        %145 = sbr.rel (%p142) target = $region12
      $region11: #{tpu_custom_call.1} parent=5 // pred_region
        %s146 = ssub.s32 %s17, 1
        // Predicated region
        $region13: #{tpu_custom_call.1} parent=11 // pred_check
          %p147 = pneg %p64
        $region14: #{tpu_custom_call.1} parent=11 // pred_check_branch
          %149 = sbr.rel (%p147) target = $region16
        $region15: #{tpu_custom_call.1} parent=11 // pred_region
          %151 = vsyncadd [#allocation6], 0
          %s152 = sshll.u32 %s1, 4
          %s153 = int_to_ptr.hbm [resolvable:$true] %s152
          %s154 = sshll.u32 [#allocation5], 4
          %s155 = int_to_ptr.vmem [resolvable:$true] %s154
          %160 = dma.hbm_to_vmem [thread:$0]  %s153, 512, %s155, [#allocation6], 128, 128, 8
        $region16: #{tpu_custom_call.1} parent=11 // pred_fallthru
          _
        // Predicated region
        $region17: #{tpu_custom_call.1} parent=11 // pred_check
          %p161 = pneg %p85
        $region18: #{tpu_custom_call.1} parent=11 // pred_check_branch
          %163 = sbr.rel (%p161) target = $region20
        $region19: #{tpu_custom_call.1} parent=11 // pred_region
          _
        $region20: #{tpu_custom_call.1} parent=11 // pred_fallthru
          _
        // Predicated region
        $region21: #{tpu_custom_call.1} parent=11 // pred_check
          %p164 = pneg %p106
        $region22: #{tpu_custom_call.1} parent=11 // pred_check_branch
          %166 = sbr.rel (%p164) target = $region24
        $region23: #{tpu_custom_call.1} parent=11 // pred_region
          _
        $region24: #{tpu_custom_call.1} parent=11 // pred_fallthru
          _
      $region12: #{tpu_custom_call.1} parent=5 // pred_fallthru
        _
      %p167 = scmp.lt.s32.totalorder %s17, 2
      // Predicated region
      $region25: #{tpu_custom_call.1} parent=5 // pred_check
        %p168 = pneg %p167
      $region26: #{tpu_custom_call.1} parent=5 // pred_check_branch
        %170 = sbr.rel (%p168) target = $region28
      $region27: #{tpu_custom_call.1} parent=5 // pred_region
        // Predicated region
        $region29: #{tpu_custom_call.1} parent=27 // pred_check
          %p171 = pneg %p37
        $region30: #{tpu_custom_call.1} parent=27 // pred_check_branch
          %173 = sbr.rel (%p171) target = $region32
        $region31: #{tpu_custom_call.1} parent=27 // pred_region
          %s174 = sand.u32 %s27, 1
          %s175 = scalar_lea.sflag [#allocation3], %s174
          %s176 = sand.u32 %s27, 1
          %s177 = smul.addr %s176, 8
          %s178 = scalar_lea.vmem [#allocation2], %s177
          %180 = vsyncadd %s175, 0
          %s181 = smul.addr %s17, 8
          %s182 = scalar_lea.hbm %s0, %s181
          %s184 = sshll.u32 %s182, 4
          %s185 = int_to_ptr.hbm [resolvable:$true] %s184
          %s186 = sshll.u32 %s178, 4
          %s187 = int_to_ptr.vmem [resolvable:$true] %s186
          %189 = dma.hbm_to_vmem [thread:$0]  %s185, 128, %s187, %s175
        $region32: #{tpu_custom_call.1} parent=27 // pred_fallthru
          _
      $region28: #{tpu_custom_call.1} parent=5 // pred_fallthru
        _
      %p190 = scmp.le.s32.totalorder 1, %s17
      %p191 = scmp.lt.s32.totalorder %s17, 3
      %p192 = pnand %p190, %p191
      %p193 = pneg %p192
      // Predicated region
      $region33: #{tpu_custom_call.1} parent=5 // pred_check
        _
      $region34: #{tpu_custom_call.1} parent=5 // pred_check_branch
        %195 = sbr.rel (%p192) target = $region36
      $region35: #{tpu_custom_call.1} parent=5 // pred_region
        %s196 = ssub.s32 %s17, 1
        %s197 = sand.u32 %s30, 1
        %s198 = scalar_lea.sflag [#allocation3], %s197
        %s199 = sand.u32 %s30, 1
        %s200 = smul.addr %s199, 8
        %s201 = scalar_lea.vmem [#allocation2], %s200
        // Predicated region
        $region37: #{tpu_custom_call.1} parent=35 // pred_check
          %p202 = pneg %p43
        $region38: #{tpu_custom_call.1} parent=35 // pred_check_branch
          %204 = sbr.rel (%p202) target = $region40
        $region39: #{tpu_custom_call.1} parent=35 // pred_region
          %206 = dma.done %s198, 128
        $region40: #{tpu_custom_call.1} parent=35 // pred_fallthru
          _
        // Predicated region
        $region41: #{tpu_custom_call.1} parent=35 // pred_check
          %p207 = pneg %p64
        $region42: #{tpu_custom_call.1} parent=35 // pred_check_branch
          %209 = sbr.rel (%p207) target = $region44
        $region43: #{tpu_custom_call.1} parent=35 // pred_region
          %211 = dma.done [#allocation6], 512
        $region44: #{tpu_custom_call.1} parent=35 // pred_fallthru
          _
        %s212 = sand.u32 %s30, 1
        %s213 = scalar_lea.sflag [#allocation3], %s212
        %s214 = sand.u32 %s30, 1
        %s215 = smul.addr %s214, 8
        %s216 = scalar_lea.vmem [#allocation2], %s215
        %p217 = pneg %p43
        %p218 = pneg %p40
        %p219 = pneg %p64
        %p220 = pneg %p61
        %p221 = pneg %p85
        %p222 = pneg %p82
        %p223 = pneg %p106
        %p224 = pneg %p103
        %p225 = pneg %p132
        %p226 = pneg %p129
        %s227 = sand.u32 %s119, 1
        %s228 = scalar_lea.sflag [#allocation4], %s227
        %s229 = sand.u32 %s119, 1
        %s230 = smul.addr %s229, 8
        %s231 = scalar_lea.vmem [#allocation7], %s230
        %v232 = vld [vmem:[%s201] sm:$0xff]
        %v233 = vld [vmem:[#allocation5] sm:$0xff]
        %v234 = vld [vmem:[#allocation5 + $0x8] sm:$0xff]
        %v235 = vld [vmem:[#allocation5 + $0x10] sm:$0xff]
        %v236 = vld [vmem:[#allocation5 + $0x18] sm:$0xff]
        %vm237 = vcmask 261120
        %v239 = vsel %vm237, %v232, 0
        %241 = vmatpush.msra.mxu0 0.0
        %242 = vmatpush.msra.mxu0 0.0
        %243 = vmatpush.msra.mxu0 0.0
        %244 = vmatpush.msra.mxu0 0.0
        %245 = vmatpush.msra.mxu0 0.0
        %246 = vmatpush.msra.mxu0 0.0
        %247 = vmatpush.msra.mxu0 0.0
        %248 = vmatpush.msra.mxu0 0.0
        %249 = vmatpush.msra.mxu0 0.0
        %250 = vmatpush.msra.mxu0 0.0
        %251 = vmatpush.msra.mxu0 0.0
        %252 = vmatpush.msra.mxu0 0.0
        %253 = vmatpush.msra.mxu0 %v236
        %254 = vmatpush.msra.mxu0 %v235
        %255 = vmatpush.msra.mxu0 %v234
        %256 = vmatpush.msra.mxu0 %v233
        %257 = vmatmul.f32.gmra.mxu0 %v239
        %v258 = vpop.f32.mrf.mxu0
        %v259 = vadd.f32 0.0, %v258
        %260 = vdwg.mxu0
        %v261 = vld [vmem:[%s2] sm:$0x1]
        %v263 = vperm.slane %v261, 0
        %v265 = vmul.f32 %v259, %v263
        %v266 = vld [vmem:[%s3] sm:$0x1]
        %v268 = vperm.slane %v266, 0
        %v270 = vadd.f32 %v265, %v268
        %v271 = vsub.f32 0.0, %v270
        %v272 = vmul.f32 %v271, 1.442695
        %v273 = vpow.pop %v272
        %v274 = vadd.f32 %v273, 1.0
        %v275 = vrcp.pop %v274
        %276 = vst [vmem:[%s231] sm:$0xff] %v275
        %s277 = sand.u32 %s119, 1
        %s278 = scalar_lea.sflag [#allocation4], %s277
        %s279 = sand.u32 %s119, 1
        %s280 = smul.addr %s279, 8
        %s281 = scalar_lea.vmem [#allocation7], %s280
        // Predicated region
        $region45: #{tpu_custom_call.1} parent=35 // pred_check
          %p282 = pneg %p129
        $region46: #{tpu_custom_call.1} parent=35 // pred_check_branch
          %284 = sbr.rel (%p282) target = $region48
        $region47: #{tpu_custom_call.1} parent=35 // pred_region
          %286 = vsyncadd %s278, 0
          %s287 = smul.addr %s22, 8
          %s288 = scalar_lea.hbm %s4, %s287
          %s290 = sshll.u32 %s281, 4
          %s291 = int_to_ptr.vmem [resolvable:$true] %s290
          %s292 = sshll.u32 %s288, 4
          %s293 = int_to_ptr.hbm [resolvable:$true] %s292
          %295 = dma.vmem_to_hbm [thread:$0]  %s291, 128, %s293, %s278
        $region48: #{tpu_custom_call.1} parent=35 // pred_fallthru
          _
      $region36: #{tpu_custom_call.1} parent=5 // pred_fallthru
        _
      %p296 = scmp.le.s32.totalorder 2, %s17
      // Predicated region
      $region49: #{tpu_custom_call.1} parent=5 // pred_check
        %p297 = pneg %p296
      $region50: #{tpu_custom_call.1} parent=5 // pred_check_branch
        %299 = sbr.rel (%p297) target = $region52
      $region51: #{tpu_custom_call.1} parent=5 // pred_region
        %s300 = ssub.s32 %s17, 2
        // Predicated region
        $region53: #{tpu_custom_call.1} parent=51 // pred_check
          %p301 = pneg %p135
        $region54: #{tpu_custom_call.1} parent=51 // pred_check_branch
          %303 = sbr.rel (%p301) target = $region56
        $region55: #{tpu_custom_call.1} parent=51 // pred_region
          %s304 = sand.u32 %s120, 1
          %s305 = scalar_lea.sflag [#allocation4], %s304
          %s306 = sand.u32 %s120, 1
          %s307 = smul.addr %s306, 8
          %s308 = scalar_lea.vmem [#allocation7], %s307
          %310 = dma.done %s305, 128
        $region56: #{tpu_custom_call.1} parent=51 // pred_fallthru
          _
      $region52: #{tpu_custom_call.1} parent=5 // pred_fallthru
        _
    $region6: #{tpu_custom_call.1} parent=1 // loop_footer
      %s21 = sadd.s32 1, %s17
    $region7: #{tpu_custom_call.1} parent=1 // loop_footer_branch
      %16 = sbr.rel target = $region3
    $region8: #{tpu_custom_call.1} parent=1 // loop_exit
      _
    %311 = vsyncpa [#allocation3], 1
    %s312 = scalar_lea.sflag [#allocation3], 1
    %313 = vsyncpa %s312, 1
    %314 = vsyncpa [#allocation6], 1
    %315 = vsyncpa [#allocation4], 1
    %s316 = scalar_lea.sflag [#allocation4], 1
    %317 = vsyncpa %s316, 1

</llo_original>
